<compile_context>
chip_gen: v7x
topology: tpu7x:2x2x1
jax: 0.10.0
libtpu: 0.0.40
codegen_flags: <defaults>
</compile_context>

<pallas_src>
import functools

import jax
import jax.numpy as jnp
from jax.experimental import pallas as pl
from jax.experimental.pallas import tpu as pltpu


def _round_up(n, m):
    return ((n + m - 1) // m) * m


def mlp_kernel(x_ref, w1_ref, b1_ref, w2_ref, b2_ref, w3_ref, b3_ref,
               y_ref, h2_ref):
    # One batch tile per grid step; weights/biases are resident every step.
    x = x_ref[...]
    h1 = jnp.dot(x, w1_ref[...], preferred_element_type=jnp.float32) + b1_ref[...]
    h1 = jnp.maximum(h1, 0.0)
    h2 = jnp.dot(h1, w2_ref[...], preferred_element_type=jnp.float32) + b2_ref[...]
    h2 = jnp.maximum(h2, 0.0)
    y = jnp.dot(h2, w3_ref[...], preferred_element_type=jnp.float32) + b3_ref[...]
    h2_ref[...] = h2.astype(h2_ref.dtype)
    y_ref[...] = y.astype(y_ref.dtype)


@jax.jit
def mlp_forward(x, params):
    """x: (B, ...) any trailing shape; returns (y_pred, h_2) like the PyTorch MLP."""
    w1, b1, w2, b2, w3, b3 = params
    batch = x.shape[0]
    x2d = x.reshape(batch, -1)                       # torch .view(batch_size, -1)
    in_dim = x2d.shape[1]
    hid1, hid2, out_dim = w1.shape[1], w2.shape[1], w3.shape[1]

    # Lane-pad all feature dims to multiples of 128; sublane-pad batch to >= 8.
    Dp  = _round_up(in_dim, 128)                     # e.g. 784 -> 896
    H1p = _round_up(hid1, 128)                       # 250 -> 256
    H2p = _round_up(hid2, 128)                       # 100 -> 128
    Op  = _round_up(out_dim, 128)                    # 10  -> 128

    B8 = _round_up(batch, 8)
    TB = B8 if B8 <= 512 else 512                    # batch tile (grid over batch)
    Bp = _round_up(B8, TB)

    def pad2(a, rows, cols):
        return jnp.pad(a, ((0, rows - a.shape[0]), (0, cols - a.shape[1])))

    xp  = pad2(x2d, Bp, Dp)
    w1p = pad2(w1, Dp,  H1p); b1p = pad2(b1, 1, H1p)
    w2p = pad2(w2, H1p, H2p); b2p = pad2(b2, 1, H2p)
    w3p = pad2(w3, H2p, Op);  b3p = pad2(b3, 1, Op)

    def resident(shape):                             # weights stay in VMEM across steps
        return pl.BlockSpec(shape, lambda i: (0, 0))

    y_p, h2_p = pl.pallas_call(
        mlp_kernel,
        out_shape=(
            jax.ShapeDtypeStruct((Bp, Op),  jnp.float32),
            jax.ShapeDtypeStruct((Bp, H2p), jnp.float32),
        ),
        grid_spec=pltpu.PrefetchScalarGridSpec(
            num_scalar_prefetch=0,
            grid=(Bp // TB,),
            in_specs=[
                pl.BlockSpec((TB, Dp), lambda i: (i, 0)),   # x tiles stream over batch
                resident((Dp,  H1p)), resident((1, H1p)),
                resident((H1p, H2p)), resident((1, H2p)),
                resident((H2p, Op)),  resident((1, Op)),
            ],
            out_specs=(
                pl.BlockSpec((TB, Op),  lambda i: (i, 0)),
                pl.BlockSpec((TB, H2p), lambda i: (i, 0)),
            ),
        ),
        compiler_params=pltpu.CompilerParams(
            dimension_semantics=("parallel",),       # v7x: shard batch grid over 2 TCs
        ),
    )(xp, w1p, b1p, w2p, b2p, w3p, b3p)

    # Slice padded lanes / rows back to the logical shapes.
    return y_p[:batch, :out_dim], h2_p[:batch, :hid2]


def init_params(key, input_dim, output_dim):
    """Deterministic parameter init (shapes mirror the nn.Linear layers)."""
    ks = jax.random.split(key, 6)

    def lin(kw, kb, fan_in, fan_out):
        bound = 1.0 / jnp.sqrt(fan_in)
        w = jax.random.uniform(kw, (fan_in, fan_out), jnp.float32, -bound, bound)
        b = jax.random.uniform(kb, (1, fan_out), jnp.float32, -bound, bound)
        return w, b

    w1, b1 = lin(ks[0], ks[1], input_dim, 250)
    w2, b2 = lin(ks[2], ks[3], 250, 100)
    w3, b3 = lin(ks[4], ks[5], 100, output_dim)
    return (w1, b1, w2, b2, w3, b3)


if __name__ == "__main__":
    key = jax.random.PRNGKey(0)
    k_x, k_p = jax.random.split(key)

    # MNIST-like small input: batch=2, (1, 28, 28) images -> input_dim=784, output_dim=10
    batch, c, h, w = 2, 1, 28, 28
    input_dim, output_dim = c * h * w, 10

    x = jax.random.normal(k_x, (batch, c, h, w), jnp.float32)
    params = init_params(k_p, input_dim, output_dim)

    y_pred, h_2 = mlp_forward(x, params)
    jax.block_until_ready((y_pred, h_2))

    # Pure-JAX reference check
    w1, b1, w2, b2, w3, b3 = params
    xf = x.reshape(batch, -1)
    r1 = jnp.maximum(xf @ w1 + b1, 0.0)
    r2 = jnp.maximum(r1 @ w2 + b2, 0.0)
    ry = r2 @ w3 + b3
    assert y_pred.shape == (batch, output_dim) and h_2.shape == (batch, 100)
    assert jnp.allclose(y_pred, ry, atol=1e-5, rtol=1e-5)
    assert jnp.allclose(h_2, r2, atol=1e-5, rtol=1e-5)

    print("KERNEL_OK")
</pallas_src>

<mosaic_0001>
module attributes {stable_mosaic.version = 11 : i64} {
  func.func @mlp_kernel(%arg0: i32, %arg1: memref<8x896xf32, #tpu.memory_space<vmem>>, %arg2: memref<896x256xf32, #tpu.memory_space<vmem>>, %arg3: memref<1x256xf32, #tpu.memory_space<vmem>>, %arg4: memref<256x128xf32, #tpu.memory_space<vmem>>, %arg5: memref<1x128xf32, #tpu.memory_space<vmem>>, %arg6: memref<128x128xf32, #tpu.memory_space<vmem>>, %arg7: memref<1x128xf32, #tpu.memory_space<vmem>>, %arg8: memref<8x128xf32, #tpu.memory_space<vmem>>, %arg9: memref<8x128xf32, #tpu.memory_space<vmem>>) attributes {dimension_semantics = [#tpu.dimension_semantics<parallel>], iteration_bounds = array<i64: 1>, scalar_prefetch = 0 : i64, scratch_operands = 0 : i64, tpu.core_type = #tpu.core_type<tc>, window_params = [{transform_indices = @transform_0, window_bounds = array<i64: 8, 896>}, {pipeline_mode = #tpu.pipeline_mode<synchronous>, transform_indices = @transform_1, window_bounds = array<i64: 896, 256>}, {pipeline_mode = #tpu.pipeline_mode<synchronous>, transform_indices = @transform_2, window_bounds = array<i64: 1, 256>}, {pipeline_mode = #tpu.pipeline_mode<synchronous>, transform_indices = @transform_3, window_bounds = array<i64: 256, 128>}, {pipeline_mode = #tpu.pipeline_mode<synchronous>, transform_indices = @transform_4, window_bounds = array<i64: 1, 128>}, {pipeline_mode = #tpu.pipeline_mode<synchronous>, transform_indices = @transform_5, window_bounds = array<i64: 128, 128>}, {pipeline_mode = #tpu.pipeline_mode<synchronous>, transform_indices = @transform_6, window_bounds = array<i64: 1, 128>}, {transform_indices = @transform_7, window_bounds = array<i64: 8, 128>}, {transform_indices = @transform_8, window_bounds = array<i64: 8, 128>}]} {
    %c0 = arith.constant 0 : index
    %c0_0 = arith.constant 0 : index
    %0 = vector.load %arg1[%c0, %c0_0] : memref<8x896xf32, #tpu.memory_space<vmem>>, vector<8x896xf32>
    %c0_1 = arith.constant 0 : index
    %c0_2 = arith.constant 0 : index
    %1 = vector.load %arg2[%c0_1, %c0_2] : memref<896x256xf32, #tpu.memory_space<vmem>>, vector<896x256xf32>
    %cst = arith.constant dense<0.000000e+00> : vector<8x256xf32>
    %2 = tpu.matmul %0, %1, %cst {dimension_numbers = #tpu.dot_dimension_numbers<[1], [0], [0], [1], [0, 0, 1, 1], [], []>} : vector<8x896xf32>, vector<896x256xf32>, vector<8x256xf32> -> vector<8x256xf32>
    %c0_3 = arith.constant 0 : index
    %c0_4 = arith.constant 0 : index
    %3 = vector.load %arg3[%c0_3, %c0_4] : memref<1x256xf32, #tpu.memory_space<vmem>>, vector<1x256xf32>
    %4 = vector.broadcast %3 : vector<1x256xf32> to vector<8x256xf32>
    %5 = arith.addf %2, %4 : vector<8x256xf32>
    %cst_5 = arith.constant 0.000000e+00 : f32
    %6 = vector.broadcast %cst_5 : f32 to vector<8x256xf32>
    %7 = arith.maximumf %5, %6 : vector<8x256xf32>
    %c0_6 = arith.constant 0 : index
    %c0_7 = arith.constant 0 : index
    %8 = vector.load %arg4[%c0_6, %c0_7] : memref<256x128xf32, #tpu.memory_space<vmem>>, vector<256x128xf32>
    %cst_8 = arith.constant dense<0.000000e+00> : vector<8x128xf32>
    %9 = tpu.matmul %7, %8, %cst_8 {dimension_numbers = #tpu.dot_dimension_numbers<[1], [0], [0], [1], [0, 0, 1, 1], [], []>} : vector<8x256xf32>, vector<256x128xf32>, vector<8x128xf32> -> vector<8x128xf32>
    %c0_9 = arith.constant 0 : index
    %c0_10 = arith.constant 0 : index
    %10 = vector.load %arg5[%c0_9, %c0_10] : memref<1x128xf32, #tpu.memory_space<vmem>>, vector<1x128xf32>
    %11 = vector.broadcast %10 : vector<1x128xf32> to vector<8x128xf32>
    %12 = arith.addf %9, %11 : vector<8x128xf32>
    %cst_11 = arith.constant 0.000000e+00 : f32
    %13 = vector.broadcast %cst_11 : f32 to vector<8x128xf32>
    %14 = arith.maximumf %12, %13 : vector<8x128xf32>
    %c0_12 = arith.constant 0 : index
    %c0_13 = arith.constant 0 : index
    %15 = vector.load %arg6[%c0_12, %c0_13] : memref<128x128xf32, #tpu.memory_space<vmem>>, vector<128x128xf32>
    %cst_14 = arith.constant dense<0.000000e+00> : vector<8x128xf32>
    %16 = tpu.matmul %14, %15, %cst_14 {dimension_numbers = #tpu.dot_dimension_numbers<[1], [0], [0], [1], [0, 0, 1, 1], [], []>} : vector<8x128xf32>, vector<128x128xf32>, vector<8x128xf32> -> vector<8x128xf32>
    %c0_15 = arith.constant 0 : index
    %c0_16 = arith.constant 0 : index
    %17 = vector.load %arg7[%c0_15, %c0_16] : memref<1x128xf32, #tpu.memory_space<vmem>>, vector<1x128xf32>
    %18 = vector.broadcast %17 : vector<1x128xf32> to vector<8x128xf32>
    %19 = arith.addf %16, %18 : vector<8x128xf32>
    %c0_17 = arith.constant 0 : index
    %c0_18 = arith.constant 0 : index
    %20 = vector.load %arg9[%c0_17, %c0_18] : memref<8x128xf32, #tpu.memory_space<vmem>>, vector<8x128xf32>
    tpu.vector_store %arg9[%c0_17, %c0_18], %14 {strides = array<i32>} : memref<8x128xf32, #tpu.memory_space<vmem>>, vector<8x128xf32>,
    %c0_19 = arith.constant 0 : index
    %c0_20 = arith.constant 0 : index
    %21 = vector.load %arg8[%c0_19, %c0_20] : memref<8x128xf32, #tpu.memory_space<vmem>>, vector<8x128xf32>
    tpu.vector_store %arg8[%c0_19, %c0_20], %19 {strides = array<i32>} : memref<8x128xf32, #tpu.memory_space<vmem>>, vector<8x128xf32>,
    return
  }
  func.func @transform_0(%arg0: i32) -> (i32, i32) {
    %c0_i32 = arith.constant 0 : i32
    %c0_i32_0 = arith.constant 0 : i32
    return %arg0, %c0_i32 : i32, i32
  }
  func.func @transform_1(%arg0: i32) -> (i32, i32) {
    %c0_i32 = arith.constant 0 : i32
    %c0_i32_0 = arith.constant 0 : i32
    %c0_i32_1 = arith.constant 0 : i32
    return %c0_i32, %c0_i32_0 : i32, i32
  }
  func.func @transform_2(%arg0: i32) -> (i32, i32) {
    %c0_i32 = arith.constant 0 : i32
    %c0_i32_0 = arith.constant 0 : i32
    %c0_i32_1 = arith.constant 0 : i32
    return %c0_i32, %c0_i32_0 : i32, i32
  }
  func.func @transform_3(%arg0: i32) -> (i32, i32) {
    %c0_i32 = arith.constant 0 : i32
    %c0_i32_0 = arith.constant 0 : i32
    %c0_i32_1 = arith.constant 0 : i32
    return %c0_i32, %c0_i32_0 : i32, i32
  }
  func.func @transform_4(%arg0: i32) -> (i32, i32) {
    %c0_i32 = arith.constant 0 : i32
    %c0_i32_0 = arith.constant 0 : i32
    %c0_i32_1 = arith.constant 0 : i32
    return %c0_i32, %c0_i32_0 : i32, i32
  }
  func.func @transform_5(%arg0: i32) -> (i32, i32) {
    %c0_i32 = arith.constant 0 : i32
    %c0_i32_0 = arith.constant 0 : i32
    %c0_i32_1 = arith.constant 0 : i32
    return %c0_i32, %c0_i32_0 : i32, i32
  }
  func.func @transform_6(%arg0: i32) -> (i32, i32) {
    %c0_i32 = arith.constant 0 : i32
    %c0_i32_0 = arith.constant 0 : i32
    %c0_i32_1 = arith.constant 0 : i32
    return %c0_i32, %c0_i32_0 : i32, i32
  }
  func.func @transform_7(%arg0: i32) -> (i32, i32) {
    %c0_i32 = arith.constant 0 : i32
    %c0_i32_0 = arith.constant 0 : i32
    return %arg0, %c0_i32 : i32, i32
  }
  func.func @transform_8(%arg0: i32) -> (i32, i32) {
    %c0_i32 = arith.constant 0 : i32
    %c0_i32_0 = arith.constant 0 : i32
    return %arg0, %c0_i32 : i32, i32
  }
}

</mosaic_0001>

<llo_original>
// kernel: mlp_forward.1
$region0: #{mlp_forward.1}
  #allocation0 [shape = 'u32[]', space=smem, size = 0x4, offset = 0x4, fixed_abs, tag = 'smem constant byte address 0x4 - core index']
  #allocation1 [shape = 'u32[144,128]{1,0:T(1,128)}', space=vmem, size = 0x12000, scoped, tag = 'internal scratch']
  %s0 = inlined_call_operand.vmem [shape: f32[8,896], index: 0, kind: input, shape index: {}]
  %s1 = inlined_call_operand.vmem [shape: f32[896,256], index: 1, kind: input, shape index: {}]
  %s2 = inlined_call_operand.vmem [shape: f32[1,256], index: 2, kind: input, shape index: {}]
  %s3 = inlined_call_operand.vmem [shape: f32[256,128], index: 3, kind: input, shape index: {}]
  %s4 = inlined_call_operand.vmem [shape: f32[1,128], index: 4, kind: input, shape index: {}]
  %s5 = inlined_call_operand.vmem [shape: f32[128,128], index: 5, kind: input, shape index: {}]
  %s6 = inlined_call_operand.vmem [shape: f32[1,128], index: 6, kind: input, shape index: {}]
  %s7 = inlined_call_operand.vmem [shape: f32[8,128], index: 7, kind: output, shape index: {0}]
  %s8 = inlined_call_operand.vmem [shape: f32[8,128], index: 8, kind: output, shape index: {1}]
  %9 = xla_tuple %s7, %s8
  %s10 = sld [smem:[#allocation0]]
  $region46: #{mlp_forward.1} parent=0
    _
  %s12 = ssub.s32 1, %s10
  %s13 = scalar_select 0, %s12, %s10
  // Predicated region
  $region2: #{mlp_forward.1} parent=0 // pred_check
    _
  $region3: #{mlp_forward.1} parent=0 // pred_check_branch
    %15 = sbr.rel (0) target = $region5
  $region4: #{mlp_forward.1} parent=0 // pred_region
    _
  $region5: #{mlp_forward.1} parent=0 // pred_fallthru
    _
  // Predicated region
  $region6: #{mlp_forward.1} parent=0 // pred_check
    _
  $region7: #{mlp_forward.1} parent=0 // pred_check_branch
    %17 = sbr.rel (0) target = $region9
  $region8: #{mlp_forward.1} parent=0 // pred_region
    _
  $region9: #{mlp_forward.1} parent=0 // pred_fallthru
    _
  // Predicated region
  $region10: #{mlp_forward.1} parent=0 // pred_check
    _
  $region11: #{mlp_forward.1} parent=0 // pred_check_branch
    %19 = sbr.rel (0) target = $region13
  $region12: #{mlp_forward.1} parent=0 // pred_region
    _
  $region13: #{mlp_forward.1} parent=0 // pred_fallthru
    _
  // Predicated region
  $region14: #{mlp_forward.1} parent=0 // pred_check
    _
  $region15: #{mlp_forward.1} parent=0 // pred_check_branch
    %21 = sbr.rel (0) target = $region17
  $region16: #{mlp_forward.1} parent=0 // pred_region
    _
  $region17: #{mlp_forward.1} parent=0 // pred_fallthru
    _
  // Predicated region
  $region18: #{mlp_forward.1} parent=0 // pred_check
    _
  $region19: #{mlp_forward.1} parent=0 // pred_check_branch
    %23 = sbr.rel (0) target = $region21
  $region20: #{mlp_forward.1} parent=0 // pred_region
    _
  $region21: #{mlp_forward.1} parent=0 // pred_fallthru
    _
  // Predicated region
  $region22: #{mlp_forward.1} parent=0 // pred_check
    _
  $region23: #{mlp_forward.1} parent=0 // pred_check_branch
    %25 = sbr.rel (0) target = $region25
  $region24: #{mlp_forward.1} parent=0 // pred_region
    _
  $region25: #{mlp_forward.1} parent=0 // pred_fallthru
    _
  // Predicated region
  $region26: #{mlp_forward.1} parent=0 // pred_check
    _
  $region27: #{mlp_forward.1} parent=0 // pred_check_branch
    %27 = sbr.rel (0) target = $region29
  $region28: #{mlp_forward.1} parent=0 // pred_region
    _
  $region29: #{mlp_forward.1} parent=0 // pred_fallthru
    _
  %v28 = vld [vmem:[%s0] sm:$0xff]
  %v29 = vld [vmem:[%s0 + $0x8] sm:$0xff]
  %v30 = vld [vmem:[%s0 + $0x10] sm:$0xff]
  %v31 = vld [vmem:[%s0 + $0x18] sm:$0xff]
  %v32 = vld [vmem:[%s0 + $0x20] sm:$0xff]
  %v33 = vld [vmem:[%s0 + $0x28] sm:$0xff]
  %v34 = vld [vmem:[%s0 + $0x30] sm:$0xff]
  %v35 = vld [vmem:[%s1] sm:$0xff]
  %v36 = vld [vmem:[%s1 + $0x8] sm:$0xff]
  %v37 = vld [vmem:[%s1 + $0x10] sm:$0xff]
  %v38 = vld [vmem:[%s1 + $0x18] sm:$0xff]
  %v39 = vld [vmem:[%s1 + $0x20] sm:$0xff]
  %v40 = vld [vmem:[%s1 + $0x28] sm:$0xff]
  %v41 = vld [vmem:[%s1 + $0x30] sm:$0xff]
  %v42 = vld [vmem:[%s1 + $0x38] sm:$0xff]
  %v43 = vld [vmem:[%s1 + $0x40] sm:$0xff]
  %v44 = vld [vmem:[%s1 + $0x48] sm:$0xff]
  %v45 = vld [vmem:[%s1 + $0x50] sm:$0xff]
  %v46 = vld [vmem:[%s1 + $0x58] sm:$0xff]
  %v47 = vld [vmem:[%s1 + $0x60] sm:$0xff]
  %v48 = vld [vmem:[%s1 + $0x68] sm:$0xff]
  %v49 = vld [vmem:[%s1 + $0x70] sm:$0xff]
  %v50 = vld [vmem:[%s1 + $0x78] sm:$0xff]
  %v51 = vld [vmem:[%s1 + $0x80] sm:$0xff]
  %v52 = vld [vmem:[%s1 + $0x88] sm:$0xff]
  %v53 = vld [vmem:[%s1 + $0x90] sm:$0xff]
  %v54 = vld [vmem:[%s1 + $0x98] sm:$0xff]
  %v55 = vld [vmem:[%s1 + $0xa0] sm:$0xff]
  %v56 = vld [vmem:[%s1 + $0xa8] sm:$0xff]
  %v57 = vld [vmem:[%s1 + $0xb0] sm:$0xff]
  %v58 = vld [vmem:[%s1 + $0xb8] sm:$0xff]
  %v59 = vld [vmem:[%s1 + $0xc0] sm:$0xff]
  %v60 = vld [vmem:[%s1 + $0xc8] sm:$0xff]
  %v61 = vld [vmem:[%s1 + $0xd0] sm:$0xff]
  %v62 = vld [vmem:[%s1 + $0xd8] sm:$0xff]
  %v63 = vld [vmem:[%s1 + $0xe0] sm:$0xff]
  %v64 = vld [vmem:[%s1 + $0xe8] sm:$0xff]
  %v65 = vld [vmem:[%s1 + $0xf0] sm:$0xff]
  %v66 = vld [vmem:[%s1 + $0xf8] sm:$0xff]
  %v67 = vld [vmem:[%s1 + $0x100] sm:$0xff]
  %v68 = vld [vmem:[%s1 + $0x108] sm:$0xff]
  %v69 = vld [vmem:[%s1 + $0x110] sm:$0xff]
  %v70 = vld [vmem:[%s1 + $0x118] sm:$0xff]
  %v71 = vld [vmem:[%s1 + $0x120] sm:$0xff]
  %v72 = vld [vmem:[%s1 + $0x128] sm:$0xff]
  %v73 = vld [vmem:[%s1 + $0x130] sm:$0xff]
  %v74 = vld [vmem:[%s1 + $0x138] sm:$0xff]
  %v75 = vld [vmem:[%s1 + $0x140] sm:$0xff]
  %v76 = vld [vmem:[%s1 + $0x148] sm:$0xff]
  %v77 = vld [vmem:[%s1 + $0x150] sm:$0xff]
  %v78 = vld [vmem:[%s1 + $0x158] sm:$0xff]
  %v79 = vld [vmem:[%s1 + $0x160] sm:$0xff]
  %v80 = vld [vmem:[%s1 + $0x168] sm:$0xff]
  %v81 = vld [vmem:[%s1 + $0x170] sm:$0xff]
  %v82 = vld [vmem:[%s1 + $0x178] sm:$0xff]
  %v83 = vld [vmem:[%s1 + $0x180] sm:$0xff]
  %v84 = vld [vmem:[%s1 + $0x188] sm:$0xff]
  %v85 = vld [vmem:[%s1 + $0x190] sm:$0xff]
  %v86 = vld [vmem:[%s1 + $0x198] sm:$0xff]
  %v87 = vld [vmem:[%s1 + $0x1a0] sm:$0xff]
  %v88 = vld [vmem:[%s1 + $0x1a8] sm:$0xff]
  %v89 = vld [vmem:[%s1 + $0x1b0] sm:$0xff]
  %v90 = vld [vmem:[%s1 + $0x1b8] sm:$0xff]
  %v91 = vld [vmem:[%s1 + $0x1c0] sm:$0xff]
  %v92 = vld [vmem:[%s1 + $0x1c8] sm:$0xff]
  %v93 = vld [vmem:[%s1 + $0x1d0] sm:$0xff]
  %v94 = vld [vmem:[%s1 + $0x1d8] sm:$0xff]
  %v95 = vld [vmem:[%s1 + $0x1e0] sm:$0xff]
  %v96 = vld [vmem:[%s1 + $0x1e8] sm:$0xff]
  %v97 = vld [vmem:[%s1 + $0x1f0] sm:$0xff]
  %v98 = vld [vmem:[%s1 + $0x1f8] sm:$0xff]
  %v99 = vld [vmem:[%s1 + $0x200] sm:$0xff]
  %v100 = vld [vmem:[%s1 + $0x208] sm:$0xff]
  %v101 = vld [vmem:[%s1 + $0x210] sm:$0xff]
  %v102 = vld [vmem:[%s1 + $0x218] sm:$0xff]
  %v103 = vld [vmem:[%s1 + $0x220] sm:$0xff]
  %v104 = vld [vmem:[%s1 + $0x228] sm:$0xff]
  %v105 = vld [vmem:[%s1 + $0x230] sm:$0xff]
  %v106 = vld [vmem:[%s1 + $0x238] sm:$0xff]
  %v107 = vld [vmem:[%s1 + $0x240] sm:$0xff]
  %v108 = vld [vmem:[%s1 + $0x248] sm:$0xff]
  %v109 = vld [vmem:[%s1 + $0x250] sm:$0xff]
  %v110 = vld [vmem:[%s1 + $0x258] sm:$0xff]
  %v111 = vld [vmem:[%s1 + $0x260] sm:$0xff]
  %v112 = vld [vmem:[%s1 + $0x268] sm:$0xff]
  %v113 = vld [vmem:[%s1 + $0x270] sm:$0xff]
  %v114 = vld [vmem:[%s1 + $0x278] sm:$0xff]
  %v115 = vld [vmem:[%s1 + $0x280] sm:$0xff]
  %v116 = vld [vmem:[%s1 + $0x288] sm:$0xff]
  %v117 = vld [vmem:[%s1 + $0x290] sm:$0xff]
  %v118 = vld [vmem:[%s1 + $0x298] sm:$0xff]
  %v119 = vld [vmem:[%s1 + $0x2a0] sm:$0xff]
  %v120 = vld [vmem:[%s1 + $0x2a8] sm:$0xff]
  %v121 = vld [vmem:[%s1 + $0x2b0] sm:$0xff]
  %v122 = vld [vmem:[%s1 + $0x2b8] sm:$0xff]
  %v123 = vld [vmem:[%s1 + $0x2c0] sm:$0xff]
  %v124 = vld [vmem:[%s1 + $0x2c8] sm:$0xff]
  %v125 = vld [vmem:[%s1 + $0x2d0] sm:$0xff]
  %v126 = vld [vmem:[%s1 + $0x2d8] sm:$0xff]
  %v127 = vld [vmem:[%s1 + $0x2e0] sm:$0xff]
  %v128 = vld [vmem:[%s1 + $0x2e8] sm:$0xff]
  %v129 = vld [vmem:[%s1 + $0x2f0] sm:$0xff]
  %v130 = vld [vmem:[%s1 + $0x2f8] sm:$0xff]
  %v131 = vld [vmem:[%s1 + $0x300] sm:$0xff]
  %v132 = vld [vmem:[%s1 + $0x308] sm:$0xff]
  %v133 = vld [vmem:[%s1 + $0x310] sm:$0xff]
  %v134 = vld [vmem:[%s1 + $0x318] sm:$0xff]
  %v135 = vld [vmem:[%s1 + $0x320] sm:$0xff]
  %v136 = vld [vmem:[%s1 + $0x328] sm:$0xff]
  %v137 = vld [vmem:[%s1 + $0x330] sm:$0xff]
  %v138 = vld [vmem:[%s1 + $0x338] sm:$0xff]
  %v139 = vld [vmem:[%s1 + $0x340] sm:$0xff]
  %v140 = vld [vmem:[%s1 + $0x348] sm:$0xff]
  %v141 = vld [vmem:[%s1 + $0x350] sm:$0xff]
  %v142 = vld [vmem:[%s1 + $0x358] sm:$0xff]
  %v143 = vld [vmem:[%s1 + $0x360] sm:$0xff]
  %v144 = vld [vmem:[%s1 + $0x368] sm:$0xff]
  %v145 = vld [vmem:[%s1 + $0x370] sm:$0xff]
  %v146 = vld [vmem:[%s1 + $0x378] sm:$0xff]
  %v147 = vld [vmem:[%s1 + $0x380] sm:$0xff]
  %v148 = vld [vmem:[%s1 + $0x388] sm:$0xff]
  %v149 = vld [vmem:[%s1 + $0x390] sm:$0xff]
  %v150 = vld [vmem:[%s1 + $0x398] sm:$0xff]
  %v151 = vld [vmem:[%s1 + $0x3a0] sm:$0xff]
  %v152 = vld [vmem:[%s1 + $0x3a8] sm:$0xff]
  %v153 = vld [vmem:[%s1 + $0x3b0] sm:$0xff]
  %v154 = vld [vmem:[%s1 + $0x3b8] sm:$0xff]
  %v155 = vld [vmem:[%s1 + $0x3c0] sm:$0xff]
  %v156 = vld [vmem:[%s1 + $0x3c8] sm:$0xff]
  %v157 = vld [vmem:[%s1 + $0x3d0] sm:$0xff]
  %v158 = vld [vmem:[%s1 + $0x3d8] sm:$0xff]
  %v159 = vld [vmem:[%s1 + $0x3e0] sm:$0xff]
  %v160 = vld [vmem:[%s1 + $0x3e8] sm:$0xff]
  %v161 = vld [vmem:[%s1 + $0x3f0] sm:$0xff]
  %v162 = vld [vmem:[%s1 + $0x3f8] sm:$0xff]
  %v163 = vld [vmem:[%s1 + $0x400] sm:$0xff]
  %v164 = vld [vmem:[%s1 + $0x408] sm:$0xff]
  %v165 = vld [vmem:[%s1 + $0x410] sm:$0xff]
  %v166 = vld [vmem:[%s1 + $0x418] sm:$0xff]
  %v167 = vld [vmem:[%s1 + $0x420] sm:$0xff]
  %v168 = vld [vmem:[%s1 + $0x428] sm:$0xff]
  %v169 = vld [vmem:[%s1 + $0x430] sm:$0xff]
  %v170 = vld [vmem:[%s1 + $0x438] sm:$0xff]
  %v171 = vld [vmem:[%s1 + $0x440] sm:$0xff]
  %v172 = vld [vmem:[%s1 + $0x448] sm:$0xff]
  %v173 = vld [vmem:[%s1 + $0x450] sm:$0xff]
  %v174 = vld [vmem:[%s1 + $0x458] sm:$0xff]
  %v175 = vld [vmem:[%s1 + $0x460] sm:$0xff]
  %v176 = vld [vmem:[%s1 + $0x468] sm:$0xff]
  %v177 = vld [vmem:[%s1 + $0x470] sm:$0xff]
  %v178 = vld [vmem:[%s1 + $0x478] sm:$0xff]
  %v179 = vld [vmem:[%s1 + $0x480] sm:$0xff]
  %v180 = vld [vmem:[%s1 + $0x488] sm:$0xff]
  %v181 = vld [vmem:[%s1 + $0x490] sm:$0xff]
  %v182 = vld [vmem:[%s1 + $0x498] sm:$0xff]
  %v183 = vld [vmem:[%s1 + $0x4a0] sm:$0xff]
  %v184 = vld [vmem:[%s1 + $0x4a8] sm:$0xff]
  %v185 = vld [vmem:[%s1 + $0x4b0] sm:$0xff]
  %v186 = vld [vmem:[%s1 + $0x4b8] sm:$0xff]
  %v187 = vld [vmem:[%s1 + $0x4c0] sm:$0xff]
  %v188 = vld [vmem:[%s1 + $0x4c8] sm:$0xff]
  %v189 = vld [vmem:[%s1 + $0x4d0] sm:$0xff]
  %v190 = vld [vmem:[%s1 + $0x4d8] sm:$0xff]
  %v191 = vld [vmem:[%s1 + $0x4e0] sm:$0xff]
  %v192 = vld [vmem:[%s1 + $0x4e8] sm:$0xff]
  %v193 = vld [vmem:[%s1 + $0x4f0] sm:$0xff]
  %v194 = vld [vmem:[%s1 + $0x4f8] sm:$0xff]
  %v195 = vld [vmem:[%s1 + $0x500] sm:$0xff]
  %v196 = vld [vmem:[%s1 + $0x508] sm:$0xff]
  %v197 = vld [vmem:[%s1 + $0x510] sm:$0xff]
  %v198 = vld [vmem:[%s1 + $0x518] sm:$0xff]
  %v199 = vld [vmem:[%s1 + $0x520] sm:$0xff]
  %v200 = vld [vmem:[%s1 + $0x528] sm:$0xff]
  %v201 = vld [vmem:[%s1 + $0x530] sm:$0xff]
  %v202 = vld [vmem:[%s1 + $0x538] sm:$0xff]
  %v203 = vld [vmem:[%s1 + $0x540] sm:$0xff]
  %v204 = vld [vmem:[%s1 + $0x548] sm:$0xff]
  %v205 = vld [vmem:[%s1 + $0x550] sm:$0xff]
  %v206 = vld [vmem:[%s1 + $0x558] sm:$0xff]
  %v207 = vld [vmem:[%s1 + $0x560] sm:$0xff]
  %v208 = vld [vmem:[%s1 + $0x568] sm:$0xff]
  %v209 = vld [vmem:[%s1 + $0x570] sm:$0xff]
  %v210 = vld [vmem:[%s1 + $0x578] sm:$0xff]
  %v211 = vld [vmem:[%s1 + $0x580] sm:$0xff]
  %v212 = vld [vmem:[%s1 + $0x588] sm:$0xff]
  %v213 = vld [vmem:[%s1 + $0x590] sm:$0xff]
  %v214 = vld [vmem:[%s1 + $0x598] sm:$0xff]
  %v215 = vld [vmem:[%s1 + $0x5a0] sm:$0xff]
  %v216 = vld [vmem:[%s1 + $0x5a8] sm:$0xff]
  %v217 = vld [vmem:[%s1 + $0x5b0] sm:$0xff]
  %v218 = vld [vmem:[%s1 + $0x5b8] sm:$0xff]
  %v219 = vld [vmem:[%s1 + $0x5c0] sm:$0xff]
  %v220 = vld [vmem:[%s1 + $0x5c8] sm:$0xff]
  %v221 = vld [vmem:[%s1 + $0x5d0] sm:$0xff]
  %v222 = vld [vmem:[%s1 + $0x5d8] sm:$0xff]
  %v223 = vld [vmem:[%s1 + $0x5e0] sm:$0xff]
  %v224 = vld [vmem:[%s1 + $0x5e8] sm:$0xff]
  %v225 = vld [vmem:[%s1 + $0x5f0] sm:$0xff]
  %v226 = vld [vmem:[%s1 + $0x5f8] sm:$0xff]
  %v227 = vld [vmem:[%s1 + $0x600] sm:$0xff]
  %v228 = vld [vmem:[%s1 + $0x608] sm:$0xff]
  %v229 = vld [vmem:[%s1 + $0x610] sm:$0xff]
  %v230 = vld [vmem:[%s1 + $0x618] sm:$0xff]
  %v231 = vld [vmem:[%s1 + $0x620] sm:$0xff]
  %v232 = vld [vmem:[%s1 + $0x628] sm:$0xff]
  %v233 = vld [vmem:[%s1 + $0x630] sm:$0xff]
  %v234 = vld [vmem:[%s1 + $0x638] sm:$0xff]
  %v235 = vld [vmem:[%s1 + $0x640] sm:$0xff]
  %v236 = vld [vmem:[%s1 + $0x648] sm:$0xff]
  %v237 = vld [vmem:[%s1 + $0x650] sm:$0xff]
  %v238 = vld [vmem:[%s1 + $0x658] sm:$0xff]
  %v239 = vld [vmem:[%s1 + $0x660] sm:$0xff]
  %v240 = vld [vmem:[%s1 + $0x668] sm:$0xff]
  %v241 = vld [vmem:[%s1 + $0x670] sm:$0xff]
  %v242 = vld [vmem:[%s1 + $0x678] sm:$0xff]
  %v243 = vld [vmem:[%s1 + $0x680] sm:$0xff]
  %v244 = vld [vmem:[%s1 + $0x688] sm:$0xff]
  %v245 = vld [vmem:[%s1 + $0x690] sm:$0xff]
  %v246 = vld [vmem:[%s1 + $0x698] sm:$0xff]
  %v247 = vld [vmem:[%s1 + $0x6a0] sm:$0xff]
  %v248 = vld [vmem:[%s1 + $0x6a8] sm:$0xff]
  %v249 = vld [vmem:[%s1 + $0x6b0] sm:$0xff]
  %v250 = vld [vmem:[%s1 + $0x6b8] sm:$0xff]
  %v251 = vld [vmem:[%s1 + $0x6c0] sm:$0xff]
  %v252 = vld [vmem:[%s1 + $0x6c8] sm:$0xff]
  %v253 = vld [vmem:[%s1 + $0x6d0] sm:$0xff]
  %v254 = vld [vmem:[%s1 + $0x6d8] sm:$0xff]
  %v255 = vld [vmem:[%s1 + $0x6e0] sm:$0xff]
  %v256 = vld [vmem:[%s1 + $0x6e8] sm:$0xff]
  %v257 = vld [vmem:[%s1 + $0x6f0] sm:$0xff]
  %v258 = vld [vmem:[%s1 + $0x6f8] sm:$0xff]
  %v259 = vld [vmem:[%s2] sm:$0x3]
  %v261 = vlaneseq
  %v262 = vshrl.u32 %v261, 7
  %v263 = vsub.s32 0, %v262
  %v264 = vrot.slane %v259, %v263
  %v265 = vlaneseq
  %v266 = vshrl.u32 %v265, 7
  %v267 = vsub.s32 1, %v266
  %v268 = vrot.slane %v259, %v267
  %271 = vmatprep.subr.mxu0 %v36
  %272 = vmatpush1.msra.mxu0 %v35
  %273 = vmatprep.subr.mxu0 %v38
  %274 = vmatpush1.msra.mxu0 %v37
  %275 = vmatprep.subr.mxu0 %v40
  %276 = vmatpush1.msra.mxu0 %v39
  %277 = vmatprep.subr.mxu0 %v42
  %278 = vmatpush1.msra.mxu0 %v41
  %279 = vmatprep.subr.mxu0 %v44
  %280 = vmatpush1.msra.mxu0 %v43
  %281 = vmatprep.subr.mxu0 %v46
  %282 = vmatpush1.msra.mxu0 %v45
  %283 = vmatprep.subr.mxu0 %v48
  %284 = vmatpush1.msra.mxu0 %v47
  %285 = vmatprep.subr.mxu0 %v50
  %286 = vmatpush1.msra.mxu0 %v49
  %287 = vmatprep.subr.mxu0 %v52
  %288 = vmatpush1.msra.mxu0 %v51
  %289 = vmatprep.subr.mxu0 %v54
  %290 = vmatpush1.msra.mxu0 %v53
  %291 = vmatprep.subr.mxu0 %v56
  %292 = vmatpush1.msra.mxu0 %v55
  %293 = vmatprep.subr.mxu0 %v58
  %294 = vmatpush1.msra.mxu0 %v57
  %295 = vmatprep.subr.mxu0 %v60
  %296 = vmatpush1.msra.mxu0 %v59
  %297 = vmatprep.subr.mxu0 %v62
  %298 = vmatpush1.msra.mxu0 %v61
  %299 = vmatprep.subr.mxu0 %v64
  %300 = vmatpush1.msra.mxu0 %v63
  %301 = vmatprep.subr.mxu0 %v66
  %302 = vmatpush1.msra.mxu0 %v65
  %303 = vmatprep.subr.mxu0 %v68
  %304 = vmatpush1.msra.mxu0 %v67
  %305 = vmatprep.subr.mxu0 %v70
  %306 = vmatpush1.msra.mxu0 %v69
  %307 = vmatprep.subr.mxu0 %v72
  %308 = vmatpush1.msra.mxu0 %v71
  %309 = vmatprep.subr.mxu0 %v74
  %310 = vmatpush1.msra.mxu0 %v73
  %311 = vmatprep.subr.mxu0 %v76
  %312 = vmatpush1.msra.mxu0 %v75
  %313 = vmatprep.subr.mxu0 %v78
  %314 = vmatpush1.msra.mxu0 %v77
  %315 = vmatprep.subr.mxu0 %v80
  %316 = vmatpush1.msra.mxu0 %v79
  %317 = vmatprep.subr.mxu0 %v82
  %318 = vmatpush1.msra.mxu0 %v81
  %319 = vmatprep.subr.mxu0 %v84
  %320 = vmatpush1.msra.mxu0 %v83
  %321 = vmatprep.subr.mxu0 %v86
  %322 = vmatpush1.msra.mxu0 %v85
  %323 = vmatprep.subr.mxu0 %v88
  %324 = vmatpush1.msra.mxu0 %v87
  %325 = vmatprep.subr.mxu0 %v90
  %326 = vmatpush1.msra.mxu0 %v89
  %327 = vmatprep.subr.mxu0 %v92
  %328 = vmatpush1.msra.mxu0 %v91
  %329 = vmatprep.subr.mxu0 %v94
  %330 = vmatpush1.msra.mxu0 %v93
  %331 = vmatprep.subr.mxu0 %v96
  %332 = vmatpush1.msra.mxu0 %v95
  %333 = vmatprep.subr.mxu0 %v98
  %334 = vmatpush1.msra.mxu0 %v97
  %335 = vmatprep.mubr.f32.mxu0 %v29
  %336 = vmatmul.mubr.f32.gmra.mrb[0].mxu0 %v28
  %v337 = vpop.f32.mrb[0].mxu0
  %v338 = vadd.f32 %v264, %v337
  %v339 = vpop.f32.mrb[0].mxu0
  %v340 = vadd.f32 %v268, %v339
  %341 = vdwg.mxu0
  %342 = vmatprep.subr.mxu0 %v100
  %343 = vmatpush1.msra.mxu0 %v99
  %344 = vmatprep.subr.mxu0 %v102
  %345 = vmatpush1.msra.mxu0 %v101
  %346 = vmatprep.subr.mxu0 %v104
  %347 = vmatpush1.msra.mxu0 %v103
  %348 = vmatprep.subr.mxu0 %v106
  %349 = vmatpush1.msra.mxu0 %v105
  %350 = vmatprep.subr.mxu0 %v108
  %351 = vmatpush1.msra.mxu0 %v107
  %352 = vmatprep.subr.mxu0 %v110
  %353 = vmatpush1.msra.mxu0 %v109
  %354 = vmatprep.subr.mxu0 %v112
  %355 = vmatpush1.msra.mxu0 %v111
  %356 = vmatprep.subr.mxu0 %v114
  %357 = vmatpush1.msra.mxu0 %v113
  %358 = vmatprep.subr.mxu0 %v116
  %359 = vmatpush1.msra.mxu0 %v115
  %360 = vmatprep.subr.mxu0 %v118
  %361 = vmatpush1.msra.mxu0 %v117
  %362 = vmatprep.subr.mxu0 %v120
  %363 = vmatpush1.msra.mxu0 %v119
  %364 = vmatprep.subr.mxu0 %v122
  %365 = vmatpush1.msra.mxu0 %v121
  %366 = vmatprep.subr.mxu0 %v124
  %367 = vmatpush1.msra.mxu0 %v123
  %368 = vmatprep.subr.mxu0 %v126
  %369 = vmatpush1.msra.mxu0 %v125
  %370 = vmatprep.subr.mxu0 %v128
  %371 = vmatpush1.msra.mxu0 %v127
  %372 = vmatprep.subr.mxu0 %v130
  %373 = vmatpush1.msra.mxu0 %v129
  %374 = vmatprep.subr.mxu0 %v132
  %375 = vmatpush1.msra.mxu0 %v131
  %376 = vmatprep.subr.mxu0 %v134
  %377 = vmatpush1.msra.mxu0 %v133
  %378 = vmatprep.subr.mxu0 %v136
  %379 = vmatpush1.msra.mxu0 %v135
  %380 = vmatprep.subr.mxu0 %v138
  %381 = vmatpush1.msra.mxu0 %v137
  %382 = vmatprep.subr.mxu0 %v140
  %383 = vmatpush1.msra.mxu0 %v139
  %384 = vmatprep.subr.mxu0 %v142
  %385 = vmatpush1.msra.mxu0 %v141
  %386 = vmatprep.subr.mxu0 %v144
  %387 = vmatpush1.msra.mxu0 %v143
  %388 = vmatprep.subr.mxu0 %v146
  %389 = vmatpush1.msra.mxu0 %v145
  %390 = vmatprep.subr.mxu0 %v148
  %391 = vmatpush1.msra.mxu0 %v147
  %392 = vmatprep.subr.mxu0 %v150
  %393 = vmatpush1.msra.mxu0 %v149
  %394 = vmatprep.subr.mxu0 %v152
  %395 = vmatpush1.msra.mxu0 %v151
  %396 = vmatprep.subr.mxu0 %v154
  %397 = vmatpush1.msra.mxu0 %v153
  %398 = vmatprep.subr.mxu0 %v156
  %399 = vmatpush1.msra.mxu0 %v155
  %400 = vmatprep.subr.mxu0 %v158
  %401 = vmatpush1.msra.mxu0 %v157
  %402 = vmatprep.subr.mxu0 %v160
  %403 = vmatpush1.msra.mxu0 %v159
  %404 = vmatprep.subr.mxu0 %v162
  %405 = vmatpush1.msra.mxu0 %v161
  %406 = vmatprep.mubr.f32.mxu0 %v31
  %407 = vmatmul.mubr.f32.gmra.mrb[0].mxu0 %v30
  %v408 = vpop.f32.mrb[0].mxu0
  %v409 = vadd.f32 %v338, %v408
  %v410 = vpop.f32.mrb[0].mxu0
  %v411 = vadd.f32 %v340, %v410
  %412 = vdwg.mxu0
  %413 = vmatprep.subr.mxu0 %v164
  %414 = vmatpush1.msra.mxu0 %v163
  %415 = vmatprep.subr.mxu0 %v166
  %416 = vmatpush1.msra.mxu0 %v165
  %417 = vmatprep.subr.mxu0 %v168
  %418 = vmatpush1.msra.mxu0 %v167
  %419 = vmatprep.subr.mxu0 %v170
  %420 = vmatpush1.msra.mxu0 %v169
  %421 = vmatprep.subr.mxu0 %v172
  %422 = vmatpush1.msra.mxu0 %v171
  %423 = vmatprep.subr.mxu0 %v174
  %424 = vmatpush1.msra.mxu0 %v173
  %425 = vmatprep.subr.mxu0 %v176
  %426 = vmatpush1.msra.mxu0 %v175
  %427 = vmatprep.subr.mxu0 %v178
  %428 = vmatpush1.msra.mxu0 %v177
  %429 = vmatprep.subr.mxu0 %v180
  %430 = vmatpush1.msra.mxu0 %v179
  %431 = vmatprep.subr.mxu0 %v182
  %432 = vmatpush1.msra.mxu0 %v181
  %433 = vmatprep.subr.mxu0 %v184
  %434 = vmatpush1.msra.mxu0 %v183
  %435 = vmatprep.subr.mxu0 %v186
  %436 = vmatpush1.msra.mxu0 %v185
  %437 = vmatprep.subr.mxu0 %v188
  %438 = vmatpush1.msra.mxu0 %v187
  %439 = vmatprep.subr.mxu0 %v190
  %440 = vmatpush1.msra.mxu0 %v189
  %441 = vmatprep.subr.mxu0 %v192
  %442 = vmatpush1.msra.mxu0 %v191
  %443 = vmatprep.subr.mxu0 %v194
  %444 = vmatpush1.msra.mxu0 %v193
  %445 = vmatprep.subr.mxu0 %v196
  %446 = vmatpush1.msra.mxu0 %v195
  %447 = vmatprep.subr.mxu0 %v198
  %448 = vmatpush1.msra.mxu0 %v197
  %449 = vmatprep.subr.mxu0 %v200
  %450 = vmatpush1.msra.mxu0 %v199
  %451 = vmatprep.subr.mxu0 %v202
  %452 = vmatpush1.msra.mxu0 %v201
  %453 = vmatprep.subr.mxu0 %v204
  %454 = vmatpush1.msra.mxu0 %v203
  %455 = vmatprep.subr.mxu0 %v206
  %456 = vmatpush1.msra.mxu0 %v205
  %457 = vmatprep.subr.mxu0 %v208
  %458 = vmatpush1.msra.mxu0 %v207
  %459 = vmatprep.subr.mxu0 %v210
  %460 = vmatpush1.msra.mxu0 %v209
  %461 = vmatprep.subr.mxu0 %v212
  %462 = vmatpush1.msra.mxu0 %v211
  %463 = vmatprep.subr.mxu0 %v214
  %464 = vmatpush1.msra.mxu0 %v213
  %465 = vmatprep.subr.mxu0 %v216
  %466 = vmatpush1.msra.mxu0 %v215
  %467 = vmatprep.subr.mxu0 %v218
  %468 = vmatpush1.msra.mxu0 %v217
  %469 = vmatprep.subr.mxu0 %v220
  %470 = vmatpush1.msra.mxu0 %v219
  %471 = vmatprep.subr.mxu0 %v222
  %472 = vmatpush1.msra.mxu0 %v221
  %473 = vmatprep.subr.mxu0 %v224
  %474 = vmatpush1.msra.mxu0 %v223
  %475 = vmatprep.subr.mxu0 %v226
  %476 = vmatpush1.msra.mxu0 %v225
  %477 = vmatprep.mubr.f32.mxu0 %v33
  %478 = vmatmul.mubr.f32.gmra.mrb[0].mxu0 %v32
  %v479 = vpop.f32.mrb[0].mxu0
  %v480 = vadd.f32 %v409, %v479
  %v481 = vpop.f32.mrb[0].mxu0
  %v482 = vadd.f32 %v411, %v481
  %483 = vdwg.mxu0
  %484 = vmatprep.subr.mxu0 %v228
  %485 = vmatpush1.msra.mxu0 %v227
  %486 = vmatprep.subr.mxu0 %v230
  %487 = vmatpush1.msra.mxu0 %v229
  %488 = vmatprep.subr.mxu0 %v232
  %489 = vmatpush1.msra.mxu0 %v231
  %490 = vmatprep.subr.mxu0 %v234
  %491 = vmatpush1.msra.mxu0 %v233
  %492 = vmatprep.subr.mxu0 %v236
  %493 = vmatpush1.msra.mxu0 %v235
  %494 = vmatprep.subr.mxu0 %v238
  %495 = vmatpush1.msra.mxu0 %v237
  %496 = vmatprep.subr.mxu0 %v240
  %497 = vmatpush1.msra.mxu0 %v239
  %498 = vmatprep.subr.mxu0 %v242
  %499 = vmatpush1.msra.mxu0 %v241
  %500 = vmatprep.subr.mxu0 %v244
  %501 = vmatpush1.msra.mxu0 %v243
  %502 = vmatprep.subr.mxu0 %v246
  %503 = vmatpush1.msra.mxu0 %v245
  %504 = vmatprep.subr.mxu0 %v248
  %505 = vmatpush1.msra.mxu0 %v247
  %506 = vmatprep.subr.mxu0 %v250
  %507 = vmatpush1.msra.mxu0 %v249
  %508 = vmatprep.subr.mxu0 %v252
  %509 = vmatpush1.msra.mxu0 %v251
  %510 = vmatprep.subr.mxu0 %v254
  %511 = vmatpush1.msra.mxu0 %v253
  %512 = vmatprep.subr.mxu0 %v256
  %513 = vmatpush1.msra.mxu0 %v255
  %514 = vmatprep.subr.mxu0 %v258
  %515 = vmatpush1.msra.mxu0 %v257
  %516 = vmatprep.subr.mxu0 0.0
  %517 = vmatpush1.msra.mxu0 0.0
  %518 = vmatprep.subr.mxu0 0.0
  %519 = vmatpush1.msra.mxu0 0.0
  %520 = vmatprep.subr.mxu0 0.0
  %521 = vmatpush1.msra.mxu0 0.0
  %522 = vmatprep.subr.mxu0 0.0
  %523 = vmatpush1.msra.mxu0 0.0
  %524 = vmatprep.subr.mxu0 0.0
  %525 = vmatpush1.msra.mxu0 0.0
  %526 = vmatprep.subr.mxu0 0.0
  %527 = vmatpush1.msra.mxu0 0.0
  %528 = vmatprep.subr.mxu0 0.0
  %529 = vmatpush1.msra.mxu0 0.0
  %530 = vmatprep.subr.mxu0 0.0
  %531 = vmatpush1.msra.mxu0 0.0
  %532 = vmatprep.subr.mxu0 0.0
  %533 = vmatpush1.msra.mxu0 0.0
  %534 = vmatprep.subr.mxu0 0.0
  %535 = vmatpush1.msra.mxu0 0.0
  %536 = vmatprep.subr.mxu0 0.0
  %537 = vmatpush1.msra.mxu0 0.0
  %538 = vmatprep.subr.mxu0 0.0
  %539 = vmatpush1.msra.mxu0 0.0
  %540 = vmatprep.subr.mxu0 0.0
  %541 = vmatpush1.msra.mxu0 0.0
  %542 = vmatprep.subr.mxu0 0.0
  %543 = vmatpush1.msra.mxu0 0.0
  %544 = vmatprep.subr.mxu0 0.0
  %545 = vmatpush1.msra.mxu0 0.0
  %546 = vmatprep.subr.mxu0 0.0
  %547 = vmatpush1.msra.mxu0 0.0
  %548 = vmatprep.mubr.f32.mxu0 0.0
  %549 = vmatmul.mubr.f32.gmra.mrb[0].mxu0 %v34
  %v550 = vpop.f32.mrb[0].mxu0
  %v551 = vadd.f32 %v480, %v550
  %v552 = vpop.f32.mrb[0].mxu0
  %v553 = vadd.f32 %v482, %v552
  %554 = vdwg.mxu0
  %v555 = vmax.f32 %v551, 0.0
  %v556 = vmax.f32 %v553, 0.0
  %v557 = vld [vmem:[%s3] sm:$0xff]
  %v558 = vld [vmem:[%s3 + $0x8] sm:$0xff]
  %v559 = vld [vmem:[%s3 + $0x10] sm:$0xff]
  %v560 = vld [vmem:[%s3 + $0x18] sm:$0xff]
  %v561 = vld [vmem:[%s3 + $0x20] sm:$0xff]
  %v562 = vld [vmem:[%s3 + $0x28] sm:$0xff]
  %v563 = vld [vmem:[%s3 + $0x30] sm:$0xff]
  %v564 = vld [vmem:[%s3 + $0x38] sm:$0xff]
  %v565 = vld [vmem:[%s3 + $0x40] sm:$0xff]
  %v566 = vld [vmem:[%s3 + $0x48] sm:$0xff]
  %v567 = vld [vmem:[%s3 + $0x50] sm:$0xff]
  %v568 = vld [vmem:[%s3 + $0x58] sm:$0xff]
  %v569 = vld [vmem:[%s3 + $0x60] sm:$0xff]
  %v570 = vld [vmem:[%s3 + $0x68] sm:$0xff]
  %v571 = vld [vmem:[%s3 + $0x70] sm:$0xff]
  %v572 = vld [vmem:[%s3 + $0x78] sm:$0xff]
  %v573 = vld [vmem:[%s3 + $0x80] sm:$0xff]
  %v574 = vld [vmem:[%s3 + $0x88] sm:$0xff]
  %v575 = vld [vmem:[%s3 + $0x90] sm:$0xff]
  %v576 = vld [vmem:[%s3 + $0x98] sm:$0xff]
  %v577 = vld [vmem:[%s3 + $0xa0] sm:$0xff]
  %v578 = vld [vmem:[%s3 + $0xa8] sm:$0xff]
  %v579 = vld [vmem:[%s3 + $0xb0] sm:$0xff]
  %v580 = vld [vmem:[%s3 + $0xb8] sm:$0xff]
  %v581 = vld [vmem:[%s3 + $0xc0] sm:$0xff]
  %v582 = vld [vmem:[%s3 + $0xc8] sm:$0xff]
  %v583 = vld [vmem:[%s3 + $0xd0] sm:$0xff]
  %v584 = vld [vmem:[%s3 + $0xd8] sm:$0xff]
  %v585 = vld [vmem:[%s3 + $0xe0] sm:$0xff]
  %v586 = vld [vmem:[%s3 + $0xe8] sm:$0xff]
  %v587 = vld [vmem:[%s3 + $0xf0] sm:$0xff]
  %v588 = vld [vmem:[%s3 + $0xf8] sm:$0xff]
  %v589 = vld [vmem:[%s4] sm:$0x1]
  %v591 = vlaneseq
  %v592 = vshrl.u32 %v591, 7
  %v593 = vsub.s32 0, %v592
  %v594 = vrot.slane %v589, %v593
  %596 = vmatprep.subr.mxu0 0.0
  %597 = vmatpush1.msra.mxu0 %v557
  %598 = vmatprep.subr.mxu0 0.0
  %599 = vmatpush1.msra.mxu0 %v558
  %600 = vmatprep.subr.mxu0 0.0
  %601 = vmatpush1.msra.mxu0 %v559
  %602 = vmatprep.subr.mxu0 0.0
  %603 = vmatpush1.msra.mxu0 %v560
  %604 = vmatprep.subr.mxu0 0.0
  %605 = vmatpush1.msra.mxu0 %v561
  %606 = vmatprep.subr.mxu0 0.0
  %607 = vmatpush1.msra.mxu0 %v562
  %608 = vmatprep.subr.mxu0 0.0
  %609 = vmatpush1.msra.mxu0 %v563
  %610 = vmatprep.subr.mxu0 0.0
  %611 = vmatpush1.msra.mxu0 %v564
  %612 = vmatprep.subr.mxu0 0.0
  %613 = vmatpush1.msra.mxu0 %v565
  %614 = vmatprep.subr.mxu0 0.0
  %615 = vmatpush1.msra.mxu0 %v566
  %616 = vmatprep.subr.mxu0 0.0
  %617 = vmatpush1.msra.mxu0 %v567
  %618 = vmatprep.subr.mxu0 0.0
  %619 = vmatpush1.msra.mxu0 %v568
  %620 = vmatprep.subr.mxu0 0.0
  %621 = vmatpush1.msra.mxu0 %v569
  %622 = vmatprep.subr.mxu0 0.0
  %623 = vmatpush1.msra.mxu0 %v570
  %624 = vmatprep.subr.mxu0 0.0
  %625 = vmatpush1.msra.mxu0 %v571
  %626 = vmatprep.subr.mxu0 0.0
  %627 = vmatpush1.msra.mxu0 %v572
  %628 = vmatprep.subr.mxu0 0.0
  %629 = vmatpush1.msra.mxu0 %v573
  %630 = vmatprep.subr.mxu0 0.0
  %631 = vmatpush1.msra.mxu0 %v574
  %632 = vmatprep.subr.mxu0 0.0
  %633 = vmatpush1.msra.mxu0 %v575
  %634 = vmatprep.subr.mxu0 0.0
  %635 = vmatpush1.msra.mxu0 %v576
  %636 = vmatprep.subr.mxu0 0.0
  %637 = vmatpush1.msra.mxu0 %v577
  %638 = vmatprep.subr.mxu0 0.0
  %639 = vmatpush1.msra.mxu0 %v578
  %640 = vmatprep.subr.mxu0 0.0
  %641 = vmatpush1.msra.mxu0 %v579
  %642 = vmatprep.subr.mxu0 0.0
  %643 = vmatpush1.msra.mxu0 %v580
  %644 = vmatprep.subr.mxu0 0.0
  %645 = vmatpush1.msra.mxu0 %v581
  %646 = vmatprep.subr.mxu0 0.0
  %647 = vmatpush1.msra.mxu0 %v582
  %648 = vmatprep.subr.mxu0 0.0
  %649 = vmatpush1.msra.mxu0 %v583
  %650 = vmatprep.subr.mxu0 0.0
  %651 = vmatpush1.msra.mxu0 %v584
  %652 = vmatprep.subr.mxu0 0.0
  %653 = vmatpush1.msra.mxu0 %v585
  %654 = vmatprep.subr.mxu0 0.0
  %655 = vmatpush1.msra.mxu0 %v586
  %656 = vmatprep.subr.mxu0 0.0
  %657 = vmatpush1.msra.mxu0 %v587
  %658 = vmatprep.subr.mxu0 0.0
  %659 = vmatpush1.msra.mxu0 %v588
  %660 = vmatprep.mubr.f32.mxu0 %v556
  %661 = vmatmul.mubr.f32.gmra.mrb[0].mxu0 %v555
  %v662 = vpop.f32.mrb[0].mxu0
  %v663 = vadd.f32 %v594, %v662
  %v664 = vpop.f32.mrb[0].mxu0
  %665 = vdwg.mxu0
  %v666 = vmax.f32 %v663, 0.0
  %v667 = vld [vmem:[%s5] sm:$0xff]
  %v668 = vld [vmem:[%s5 + $0x8] sm:$0xff]
  %v669 = vld [vmem:[%s5 + $0x10] sm:$0xff]
  %v670 = vld [vmem:[%s5 + $0x18] sm:$0xff]
  %v671 = vld [vmem:[%s5 + $0x20] sm:$0xff]
  %v672 = vld [vmem:[%s5 + $0x28] sm:$0xff]
  %v673 = vld [vmem:[%s5 + $0x30] sm:$0xff]
  %v674 = vld [vmem:[%s5 + $0x38] sm:$0xff]
  %v675 = vld [vmem:[%s5 + $0x40] sm:$0xff]
  %v676 = vld [vmem:[%s5 + $0x48] sm:$0xff]
  %v677 = vld [vmem:[%s5 + $0x50] sm:$0xff]
  %v678 = vld [vmem:[%s5 + $0x58] sm:$0xff]
  %v679 = vld [vmem:[%s5 + $0x60] sm:$0xff]
  %v680 = vld [vmem:[%s5 + $0x68] sm:$0xff]
  %v681 = vld [vmem:[%s5 + $0x70] sm:$0xff]
  %v682 = vld [vmem:[%s5 + $0x78] sm:$0xff]
  %v683 = vld [vmem:[%s6] sm:$0x1]
  %v685 = vlaneseq
  %v686 = vshrl.u32 %v685, 7
  %v687 = vsub.s32 0, %v686
  %v688 = vrot.slane %v683, %v687
  %690 = vmatprep.subr.mxu0 0.0
  %691 = vmatpush1.msra.mxu0 %v667
  %692 = vmatprep.subr.mxu0 0.0
  %693 = vmatpush1.msra.mxu0 %v668
  %694 = vmatprep.subr.mxu0 0.0
  %695 = vmatpush1.msra.mxu0 %v669
  %696 = vmatprep.subr.mxu0 0.0
  %697 = vmatpush1.msra.mxu0 %v670
  %698 = vmatprep.subr.mxu0 0.0
  %699 = vmatpush1.msra.mxu0 %v671
  %700 = vmatprep.subr.mxu0 0.0
  %701 = vmatpush1.msra.mxu0 %v672
  %702 = vmatprep.subr.mxu0 0.0
  %703 = vmatpush1.msra.mxu0 %v673
  %704 = vmatprep.subr.mxu0 0.0
  %705 = vmatpush1.msra.mxu0 %v674
  %706 = vmatprep.subr.mxu0 0.0
  %707 = vmatpush1.msra.mxu0 %v675
  %708 = vmatprep.subr.mxu0 0.0
  %709 = vmatpush1.msra.mxu0 %v676
  %710 = vmatprep.subr.mxu0 0.0
  %711 = vmatpush1.msra.mxu0 %v677
  %712 = vmatprep.subr.mxu0 0.0
  %713 = vmatpush1.msra.mxu0 %v678
  %714 = vmatprep.subr.mxu0 0.0
  %715 = vmatpush1.msra.mxu0 %v679
  %716 = vmatprep.subr.mxu0 0.0
  %717 = vmatpush1.msra.mxu0 %v680
  %718 = vmatprep.subr.mxu0 0.0
  %719 = vmatpush1.msra.mxu0 %v681
  %720 = vmatprep.subr.mxu0 0.0
  %721 = vmatpush1.msra.mxu0 %v682
  %722 = vmatprep.subr.mxu0 0.0
  %723 = vmatpush1.msra.mxu0 0.0
  %724 = vmatprep.subr.mxu0 0.0
  %725 = vmatpush1.msra.mxu0 0.0
  %726 = vmatprep.subr.mxu0 0.0
  %727 = vmatpush1.msra.mxu0 0.0
  %728 = vmatprep.subr.mxu0 0.0
  %729 = vmatpush1.msra.mxu0 0.0
  %730 = vmatprep.subr.mxu0 0.0
  %731 = vmatpush1.msra.mxu0 0.0
  %732 = vmatprep.subr.mxu0 0.0
  %733 = vmatpush1.msra.mxu0 0.0
  %734 = vmatprep.subr.mxu0 0.0
  %735 = vmatpush1.msra.mxu0 0.0
  %736 = vmatprep.subr.mxu0 0.0
  %737 = vmatpush1.msra.mxu0 0.0
  %738 = vmatprep.subr.mxu0 0.0
  %739 = vmatpush1.msra.mxu0 0.0
  %740 = vmatprep.subr.mxu0 0.0
  %741 = vmatpush1.msra.mxu0 0.0
  %742 = vmatprep.subr.mxu0 0.0
  %743 = vmatpush1.msra.mxu0 0.0
  %744 = vmatprep.subr.mxu0 0.0
  %745 = vmatpush1.msra.mxu0 0.0
  %746 = vmatprep.subr.mxu0 0.0
  %747 = vmatpush1.msra.mxu0 0.0
  %748 = vmatprep.subr.mxu0 0.0
  %749 = vmatpush1.msra.mxu0 0.0
  %750 = vmatprep.subr.mxu0 0.0
  %751 = vmatpush1.msra.mxu0 0.0
  %752 = vmatprep.subr.mxu0 0.0
  %753 = vmatpush1.msra.mxu0 0.0
  %754 = vmatprep.mubr.f32.mxu0 0.0
  %755 = vmatmul.mubr.f32.gmra.mrb[0].mxu0 %v666
  %v756 = vpop.f32.mrb[0].mxu0
  %v757 = vadd.f32 %v688, %v756
  %v758 = vpop.f32.mrb[0].mxu0
  %759 = vdwg.mxu0
  %760 = vst [vmem:[%s8] sm:$0xff] %v666
  %761 = vst [vmem:[%s7] sm:$0xff] %v757
  // Predicated region
  $region30: #{mlp_forward.1} parent=0 // pred_check
    _
  $region31: #{mlp_forward.1} parent=0 // pred_check_branch
    %763 = sbr.rel (0) target = $region33
  $region32: #{mlp_forward.1} parent=0 // pred_region
    _
  $region33: #{mlp_forward.1} parent=0 // pred_fallthru
    _
  // Predicated region
  $region34: #{mlp_forward.1} parent=0 // pred_check
    _
  $region35: #{mlp_forward.1} parent=0 // pred_check_branch
    %765 = sbr.rel (0) target = $region37
  $region36: #{mlp_forward.1} parent=0 // pred_region
    _
  $region37: #{mlp_forward.1} parent=0 // pred_fallthru
    _
  // Predicated region
  $region38: #{mlp_forward.1} parent=0 // pred_check
    _
  $region39: #{mlp_forward.1} parent=0 // pred_check_branch
    %767 = sbr.rel (0) target = $region41
  $region40: #{mlp_forward.1} parent=0 // pred_region
    _
  $region41: #{mlp_forward.1} parent=0 // pred_fallthru
    _
  // Predicated region
  $region42: #{mlp_forward.1} parent=0 // pred_check
    _
  $region43: #{mlp_forward.1} parent=0 // pred_check_branch
    %769 = sbr.rel (0) target = $region45
  $region44: #{mlp_forward.1} parent=0 // pred_region
    _
  $region45: #{mlp_forward.1} parent=0 // pred_fallthru
    _

</llo_original>
